<compile_context>
chip_gen: v7x
topology: tpu7x:2x2x1
jax: 0.10.0
libtpu: 0.0.40
codegen_flags: <defaults>
</compile_context>

<pallas_src>
import jax
import jax.numpy as jnp
from jax.experimental import pallas as pl
from jax.experimental.pallas import tpu as pltpu


def _round_up(a, b):
    return ((a + b - 1) // b) * b


# ---------------------------------------------------------------------------
# Mish
# ---------------------------------------------------------------------------
def _mish(x):
    # mish(x) = x * tanh(softplus(x))
    # tanh(softplus(x)) = ((1+e^x)^2 - 1) / ((1+e^x)^2 + 1)
    #                   = e^x (e^x + 2) / (e^x (e^x + 2) + 2)
    # -> one EUP exp + one divide instead of exp + log1p + tanh.
    e = jnp.exp(jnp.minimum(x, 20.0))          # clamp: no overflow / NaN
    num = e * (e + 2.0)
    t = num / (num + 2.0)
    return jnp.where(x > 20.0, x, x * t)       # for large x, mish(x) ~= x


def _mish_ref(x):
    # Independent, numerically-stable formulation for the reference check.
    sp = jnp.maximum(x, 0.0) + jnp.log1p(jnp.exp(-jnp.abs(x)))
    return x * jnp.tanh(sp)


# ---------------------------------------------------------------------------
# Kernels
# ---------------------------------------------------------------------------
def block_kernel_identity(x_ref, scale_ref, shift_ref, w1_ref, b1_ref,
                          w2_ref, b2_ref, o_ref):
    """in_features == out_features: skip is a plain residual add."""
    x = x_ref[...]                                             # (TN, Fin)
    xn = x * scale_ref[...] + shift_ref[...]                   # BatchNorm (eval)
    h = _mish(xn)
    h1 = jnp.dot(h, w1_ref[...],
                 preferred_element_type=jnp.float32) + b1_ref[...]
    h2 = _mish(h1)
    y = jnp.dot(h2, w2_ref[...],
                preferred_element_type=jnp.float32) + b2_ref[...]
    o_ref[...] = (y + x).astype(o_ref.dtype)                   # identity skip


def block_kernel_proj(x_ref, scale_ref, shift_ref, w1_ref, b1_ref,
                      wcat_ref, b2_ref, o_ref):
    """in_features != out_features: skip projection fused into Linear2.

    wcat = concat([W2; Ws], axis=0), so
      y = concat([h2, x], -1) @ wcat + b2  ==  h2 @ W2 + b2 + x @ Ws.
    """
    x = x_ref[...]                                             # (TN, Fin)
    xn = x * scale_ref[...] + shift_ref[...]
    h = _mish(xn)
    h1 = jnp.dot(h, w1_ref[...],
                 preferred_element_type=jnp.float32) + b1_ref[...]
    h2 = _mish(h1)
    hx = jnp.concatenate([h2, x], axis=-1)                     # (TN, Fh+Fin)
    y = jnp.dot(hx, wcat_ref[...],
                preferred_element_type=jnp.float32) + b2_ref[...]
    o_ref[...] = y.astype(o_ref.dtype)


# ---------------------------------------------------------------------------
# Wrapper
# ---------------------------------------------------------------------------
def block_forward(x, params, tile_n=512):
    """x: (N, in_features) float32.  params: dict from init_params."""
    n, in_f = x.shape
    w1, w2 = params["w1"], params["w2"]
    hid_f, out_f = w1.shape[1], w2.shape[1]
    has_proj = "ws" in params

    # Lane-dense padded feature dims (multiples of 128).
    in_fp = _round_up(in_f, 128)
    hid_fp = _round_up(hid_f, 128)
    out_fp = _round_up(out_f, 128)

    # Batch tile: multiple of 8 sublanes, capped so weights + double-buffered
    # x/out tiles comfortably fit the smallest (v7x, 64 MiB) VMEM budget.
    tn = min(tile_n, _round_up(n, 8))
    n_pad = _round_up(n, tn)

    f32 = jnp.float32
    xp = jnp.pad(x.astype(f32), ((0, n_pad - n), (0, in_fp - in_f)))
    scale = jnp.pad(params["bn_scale"], ((0, 0), (0, in_fp - in_f)))
    shift = jnp.pad(params["bn_shift"], ((0, 0), (0, in_fp - in_f)))
    w1p = jnp.pad(w1, ((0, in_fp - in_f), (0, hid_fp - hid_f)))
    b1p = jnp.pad(params["b1"], ((0, 0), (0, hid_fp - hid_f)))
    w2p = jnp.pad(w2, ((0, hid_fp - hid_f), (0, out_fp - out_f)))
    b2p = jnp.pad(params["b2"], ((0, 0), (0, out_fp - out_f)))

    grid = (pl.cdiv(n_pad, tn),)
    row_spec = lambda f: pl.BlockSpec((tn, f), lambda i: (i, 0))      # streamed
    const_spec = lambda s: pl.BlockSpec(s, lambda i: (0, 0))          # resident

    compiler_params = pltpu.CompilerParams(
        dimension_semantics=("parallel",),          # megacore on v7x
        vmem_limit_bytes=48 * 1024 * 1024,
    )

    if has_proj:
        wsp = jnp.pad(params["ws"], ((0, in_fp - in_f), (0, out_fp - out_f)))
        wcat = jnp.concatenate([w2p, wsp], axis=0)  # (hid_fp + in_fp, out_fp)
        kernel = block_kernel_proj
        in_specs = [
            row_spec(in_fp),                        # x
            const_spec((1, in_fp)),                 # bn scale
            const_spec((1, in_fp)),                 # bn shift
            const_spec((in_fp, hid_fp)),            # W1^T
            const_spec((1, hid_fp)),                # b1
            const_spec((hid_fp + in_fp, out_fp)),   # [W2^T ; Ws^T]
            const_spec((1, out_fp)),                # b2
        ]
        operands = (xp, scale, shift, w1p, b1p, wcat, b2p)
    else:
        kernel = block_kernel_identity
        in_specs = [
            row_spec(in_fp),                        # x
            const_spec((1, in_fp)),                 # bn scale
            const_spec((1, in_fp)),                 # bn shift
            const_spec((in_fp, hid_fp)),            # W1^T
            const_spec((1, hid_fp)),                # b1
            const_spec((hid_fp, out_fp)),           # W2^T
            const_spec((1, out_fp)),                # b2
        ]
        operands = (xp, scale, shift, w1p, b1p, w2p, b2p)

    out_padded = pl.pallas_call(
        kernel,
        out_shape=jax.ShapeDtypeStruct((n_pad, out_fp), jnp.float32),
        grid=grid,
        in_specs=in_specs,
        out_specs=row_spec(out_fp),
        compiler_params=compiler_params,
    )(*operands)

    return out_padded[:n, :out_f]


# ---------------------------------------------------------------------------
# Parameter init (eval-mode BatchNorm folded to scale/shift)
# ---------------------------------------------------------------------------
def init_params(key, in_features, out_features, hidden_features=None):
    if hidden_features is None:
        hidden_features = out_features
    ks = jax.random.split(key, 8)
    eps = 1e-5

    gamma = jax.random.normal(ks[0], (in_features,)) * 0.1 + 1.0
    beta = jax.random.normal(ks[1], (in_features,)) * 0.1
    running_mean = jax.random.normal(ks[2], (in_features,)) * 0.1
    running_var = jnp.abs(jax.random.normal(ks[3], (in_features,))) * 0.1 + 1.0
    scale = gamma / jnp.sqrt(running_var + eps)
    shift = beta - running_mean * scale

    def linear_w(k, fan_in, fan_out):
        bound = 1.0 / jnp.sqrt(fan_in)
        # PyTorch stores (out, in); pre-transpose to (in, out) for x @ W^T.
        return jax.random.uniform(k, (fan_in, fan_out), minval=-bound,
                                  maxval=bound).astype(jnp.float32)

    w1 = linear_w(ks[4], in_features, hidden_features)
    b1 = jax.random.uniform(ks[5], (1, hidden_features),
                            minval=-1.0 / jnp.sqrt(in_features),
                            maxval=1.0 / jnp.sqrt(in_features))
    w2 = linear_w(ks[6], hidden_features, out_features)
    b2 = jax.random.uniform(ks[7], (1, out_features),
                            minval=-1.0 / jnp.sqrt(hidden_features),
                            maxval=1.0 / jnp.sqrt(hidden_features))

    params = dict(bn_scale=scale.reshape(1, -1).astype(jnp.float32),
                  bn_shift=shift.reshape(1, -1).astype(jnp.float32),
                  w1=w1, b1=b1.astype(jnp.float32),
                  w2=w2, b2=b2.astype(jnp.float32))
    if in_features != out_features:
        params["ws"] = linear_w(jax.random.fold_in(key, 99),
                                in_features, out_features)
    return params


def block_reference(x, p):
    xn = x * p["bn_scale"] + p["bn_shift"]
    h = _mish_ref(xn)
    h1 = h @ p["w1"] + p["b1"]
    h2 = _mish_ref(h1)
    y = h2 @ p["w2"] + p["b2"]
    skip = x @ p["ws"] if "ws" in p else x
    return y + skip


if __name__ == "__main__":
    key = jax.random.PRNGKey(0)
    kx, kp1, kp2 = jax.random.split(key, 3)

    # Case 1: in != out  -> projected (fused) skip path.
    N, IN_F, HID_F, OUT_F = 8, 32, 64, 16
    x = jax.random.normal(kx, (N, IN_F), dtype=jnp.float32)
    p1 = init_params(kp1, IN_F, OUT_F, HID_F)
    out1 = jax.block_until_ready(block_forward(x, p1))
    ref1 = block_reference(x, p1)
    assert out1.shape == (N, OUT_F)
    assert jnp.allclose(out1, ref1, atol=5e-4, rtol=5e-4), "proj-skip mismatch"

    # Case 2: in == out  -> identity skip path (no skip matmul at all).
    p2 = init_params(kp2, IN_F, IN_F, HID_F)
    out2 = jax.block_until_ready(block_forward(x, p2))
    ref2 = block_reference(x, p2)
    assert out2.shape == (N, IN_F)
    assert jnp.allclose(out2, ref2, atol=5e-4, rtol=5e-4), "identity-skip mismatch"

    print("KERNEL_OK")
</pallas_src>

<mosaic_0001>
module attributes {stable_mosaic.version = 11 : i64} {
  func.func @block_kernel_proj(%arg0: i32, %arg1: memref<8x128xf32, #tpu.memory_space<vmem>>, %arg2: memref<1x128xf32, #tpu.memory_space<vmem>>, %arg3: memref<1x128xf32, #tpu.memory_space<vmem>>, %arg4: memref<128x128xf32, #tpu.memory_space<vmem>>, %arg5: memref<1x128xf32, #tpu.memory_space<vmem>>, %arg6: memref<256x128xf32, #tpu.memory_space<vmem>>, %arg7: memref<1x128xf32, #tpu.memory_space<vmem>>, %arg8: memref<8x128xf32, #tpu.memory_space<vmem>>) attributes {dimension_semantics = [#tpu.dimension_semantics<parallel>], iteration_bounds = array<i64: 1>, scalar_prefetch = 0 : i64, scratch_operands = 0 : i64, tpu.core_type = #tpu.core_type<tc>, window_params = [{transform_indices = @transform_0, window_bounds = array<i64: 8, 128>}, {pipeline_mode = #tpu.pipeline_mode<synchronous>, transform_indices = @transform_1, window_bounds = array<i64: 1, 128>}, {pipeline_mode = #tpu.pipeline_mode<synchronous>, transform_indices = @transform_2, window_bounds = array<i64: 1, 128>}, {pipeline_mode = #tpu.pipeline_mode<synchronous>, transform_indices = @transform_3, window_bounds = array<i64: 128, 128>}, {pipeline_mode = #tpu.pipeline_mode<synchronous>, transform_indices = @transform_4, window_bounds = array<i64: 1, 128>}, {pipeline_mode = #tpu.pipeline_mode<synchronous>, transform_indices = @transform_5, window_bounds = array<i64: 256, 128>}, {pipeline_mode = #tpu.pipeline_mode<synchronous>, transform_indices = @transform_6, window_bounds = array<i64: 1, 128>}, {transform_indices = @transform_7, window_bounds = array<i64: 8, 128>}]} {
    %c0 = arith.constant 0 : index
    %c0_0 = arith.constant 0 : index
    %0 = vector.load %arg1[%c0, %c0_0] : memref<8x128xf32, #tpu.memory_space<vmem>>, vector<8x128xf32>
    %c0_1 = arith.constant 0 : index
    %c0_2 = arith.constant 0 : index
    %1 = vector.load %arg2[%c0_1, %c0_2] : memref<1x128xf32, #tpu.memory_space<vmem>>, vector<1x128xf32>
    %2 = vector.broadcast %1 : vector<1x128xf32> to vector<8x128xf32>
    %3 = arith.mulf %0, %2 : vector<8x128xf32>
    %c0_3 = arith.constant 0 : index
    %c0_4 = arith.constant 0 : index
    %4 = vector.load %arg3[%c0_3, %c0_4] : memref<1x128xf32, #tpu.memory_space<vmem>>, vector<1x128xf32>
    %5 = vector.broadcast %4 : vector<1x128xf32> to vector<8x128xf32>
    %6 = arith.addf %3, %5 : vector<8x128xf32>
    %cst = arith.constant 2.000000e+01 : f32
    %7 = vector.broadcast %cst : f32 to vector<8x128xf32>
    %8 = arith.minimumf %6, %7 : vector<8x128xf32>
    %9 = math.exp %8 : vector<8x128xf32>
    %cst_5 = arith.constant 2.000000e+00 : f32
    %10 = vector.broadcast %cst_5 : f32 to vector<8x128xf32>
    %11 = arith.addf %9, %10 : vector<8x128xf32>
    %12 = arith.mulf %9, %11 : vector<8x128xf32>
    %cst_6 = arith.constant 2.000000e+00 : f32
    %13 = vector.broadcast %cst_6 : f32 to vector<8x128xf32>
    %14 = arith.addf %12, %13 : vector<8x128xf32>
    %15 = arith.divf %12, %14 : vector<8x128xf32>
    %cst_7 = arith.constant 2.000000e+01 : f32
    %16 = vector.broadcast %cst_7 : f32 to vector<8x128xf32>
    %17 = arith.cmpf ogt, %6, %16 : vector<8x128xf32>
    %18 = arith.mulf %6, %15 : vector<8x128xf32>
    %19 = arith.select %17, %6, %18 : vector<8x128xi1>, vector<8x128xf32>
    %c0_8 = arith.constant 0 : index
    %c0_9 = arith.constant 0 : index
    %20 = vector.load %arg4[%c0_8, %c0_9] : memref<128x128xf32, #tpu.memory_space<vmem>>, vector<128x128xf32>
    %cst_10 = arith.constant dense<0.000000e+00> : vector<8x128xf32>
    %21 = tpu.matmul %19, %20, %cst_10 {dimension_numbers = #tpu.dot_dimension_numbers<[1], [0], [0], [1], [0, 0, 1, 1], [], []>} : vector<8x128xf32>, vector<128x128xf32>, vector<8x128xf32> -> vector<8x128xf32>
    %c0_11 = arith.constant 0 : index
    %c0_12 = arith.constant 0 : index
    %22 = vector.load %arg5[%c0_11, %c0_12] : memref<1x128xf32, #tpu.memory_space<vmem>>, vector<1x128xf32>
    %23 = vector.broadcast %22 : vector<1x128xf32> to vector<8x128xf32>
    %24 = arith.addf %21, %23 : vector<8x128xf32>
    %cst_13 = arith.constant 2.000000e+01 : f32
    %25 = vector.broadcast %cst_13 : f32 to vector<8x128xf32>
    %26 = arith.minimumf %24, %25 : vector<8x128xf32>
    %27 = math.exp %26 : vector<8x128xf32>
    %cst_14 = arith.constant 2.000000e+00 : f32
    %28 = vector.broadcast %cst_14 : f32 to vector<8x128xf32>
    %29 = arith.addf %27, %28 : vector<8x128xf32>
    %30 = arith.mulf %27, %29 : vector<8x128xf32>
    %cst_15 = arith.constant 2.000000e+00 : f32
    %31 = vector.broadcast %cst_15 : f32 to vector<8x128xf32>
    %32 = arith.addf %30, %31 : vector<8x128xf32>
    %33 = arith.divf %30, %32 : vector<8x128xf32>
    %cst_16 = arith.constant 2.000000e+01 : f32
    %34 = vector.broadcast %cst_16 : f32 to vector<8x128xf32>
    %35 = arith.cmpf ogt, %24, %34 : vector<8x128xf32>
    %36 = arith.mulf %24, %33 : vector<8x128xf32>
    %37 = arith.select %35, %24, %36 : vector<8x128xi1>, vector<8x128xf32>
    %38 = tpu.concatenate %37, %0 in 1 : vector<8x128xf32>, vector<8x128xf32> -> vector<8x256xf32>
    %c0_17 = arith.constant 0 : index
    %c0_18 = arith.constant 0 : index
    %39 = vector.load %arg6[%c0_17, %c0_18] : memref<256x128xf32, #tpu.memory_space<vmem>>, vector<256x128xf32>
    %cst_19 = arith.constant dense<0.000000e+00> : vector<8x128xf32>
    %40 = tpu.matmul %38, %39, %cst_19 {dimension_numbers = #tpu.dot_dimension_numbers<[1], [0], [0], [1], [0, 0, 1, 1], [], []>} : vector<8x256xf32>, vector<256x128xf32>, vector<8x128xf32> -> vector<8x128xf32>
    %c0_20 = arith.constant 0 : index
    %c0_21 = arith.constant 0 : index
    %41 = vector.load %arg7[%c0_20, %c0_21] : memref<1x128xf32, #tpu.memory_space<vmem>>, vector<1x128xf32>
    %42 = vector.broadcast %41 : vector<1x128xf32> to vector<8x128xf32>
    %43 = arith.addf %40, %42 : vector<8x128xf32>
    %c0_22 = arith.constant 0 : index
    %c0_23 = arith.constant 0 : index
    %44 = vector.load %arg8[%c0_22, %c0_23] : memref<8x128xf32, #tpu.memory_space<vmem>>, vector<8x128xf32>
    tpu.vector_store %arg8[%c0_22, %c0_23], %43 {strides = array<i32>} : memref<8x128xf32, #tpu.memory_space<vmem>>, vector<8x128xf32>,
    return
  }
  func.func @transform_0(%arg0: i32) -> (i32, i32) {
    %c0_i32 = arith.constant 0 : i32
    %c0_i32_0 = arith.constant 0 : i32
    return %arg0, %c0_i32 : i32, i32
  }
  func.func @transform_1(%arg0: i32) -> (i32, i32) {
    %c0_i32 = arith.constant 0 : i32
    %c0_i32_0 = arith.constant 0 : i32
    %c0_i32_1 = arith.constant 0 : i32
    return %c0_i32, %c0_i32_0 : i32, i32
  }
  func.func @transform_2(%arg0: i32) -> (i32, i32) {
    %c0_i32 = arith.constant 0 : i32
    %c0_i32_0 = arith.constant 0 : i32
    %c0_i32_1 = arith.constant 0 : i32
    return %c0_i32, %c0_i32_0 : i32, i32
  }
  func.func @transform_3(%arg0: i32) -> (i32, i32) {
    %c0_i32 = arith.constant 0 : i32
    %c0_i32_0 = arith.constant 0 : i32
    %c0_i32_1 = arith.constant 0 : i32
    return %c0_i32, %c0_i32_0 : i32, i32
  }
  func.func @transform_4(%arg0: i32) -> (i32, i32) {
    %c0_i32 = arith.constant 0 : i32
    %c0_i32_0 = arith.constant 0 : i32
    %c0_i32_1 = arith.constant 0 : i32
    return %c0_i32, %c0_i32_0 : i32, i32
  }
  func.func @transform_5(%arg0: i32) -> (i32, i32) {
    %c0_i32 = arith.constant 0 : i32
    %c0_i32_0 = arith.constant 0 : i32
    %c0_i32_1 = arith.constant 0 : i32
    return %c0_i32, %c0_i32_0 : i32, i32
  }
  func.func @transform_6(%arg0: i32) -> (i32, i32) {
    %c0_i32 = arith.constant 0 : i32
    %c0_i32_0 = arith.constant 0 : i32
    %c0_i32_1 = arith.constant 0 : i32
    return %c0_i32, %c0_i32_0 : i32, i32
  }
  func.func @transform_7(%arg0: i32) -> (i32, i32) {
    %c0_i32 = arith.constant 0 : i32
    %c0_i32_0 = arith.constant 0 : i32
    return %arg0, %c0_i32 : i32, i32
  }
}

</mosaic_0001>

<llo_original>
// kernel: tpu_custom_call.1
$region0: #{tpu_custom_call.1}
  #allocation0 [shape = 'u32[]', space=smem, size = 0x4, offset = 0x4, fixed_abs, tag = 'smem constant byte address 0x4 - core index']
  #allocation1 [shape = 'u32[144,128]{1,0:T(1,128)}', space=vmem, size = 0x12000, scoped, tag = 'internal scratch']
  %s0 = inlined_call_operand.hbm [shape: f32[8,128], index: 0, kind: input, shape index: {}]
  %s1 = inlined_call_operand.vmem [shape: f32[1,128], index: 1, kind: input, shape index: {}]
  %s2 = inlined_call_operand.vmem [shape: f32[1,128], index: 2, kind: input, shape index: {}]
  %s3 = inlined_call_operand.hbm [shape: f32[128,128], index: 3, kind: input, shape index: {}]
  %s4 = inlined_call_operand.vmem [shape: f32[1,128], index: 4, kind: input, shape index: {}]
  %s5 = inlined_call_operand.hbm [shape: f32[256,128], index: 5, kind: input, shape index: {}]
  %s6 = inlined_call_operand.vmem [shape: f32[1,128], index: 6, kind: input, shape index: {}]
  %s7 = inlined_call_operand.hbm [shape: f32[8,128], index: 7, kind: output, shape index: {}]
  %s8 = sld [smem:[#allocation0]]
  $region50: #{tpu_custom_call.1} parent=0
    _
  %s10 = ssub.s32 1, %s8
  %s11 = scalar_select 0, %s10, %s8
  $region1: #{tpu_custom_call.1} parent=0
    #allocation2 [shape = 'u8[4096]{0}', space=vmem, size = 0x1000, scoped, tag = 'input window, operand 0, single buffered']
    #allocation3 [shape = 's32[1]{0}', space=sflag, size = 0x4, scoped, tag = 'scoped memory for tpu_custom_call.1']
    #allocation4 [shape = 's32[1]{0}', space=sflag, size = 0x4, scoped, tag = 'scoped memory for tpu_custom_call.1']
    #allocation5 [shape = 'u8[65536]{0}', space=vmem, size = 0x10000, scoped, tag = 'input window, operand 3, single buffered']
    #allocation6 [shape = 's32[1]{0}', space=sflag, size = 0x4, scoped, tag = 'scoped memory for tpu_custom_call.1']
    #allocation7 [shape = 'u8[131072]{0}', space=vmem, size = 0x20000, scoped, tag = 'input window, operand 5, single buffered']
    #allocation8 [shape = 'u8[4096]{0}', space=vmem, size = 0x1000, scoped, tag = 'output window, operand 0, single buffered']
    %12 = vsyncpa [#allocation3], 0
    %13 = vsyncpa [#allocation6], 0
    %14 = vsyncpa [#allocation4], 0
    // Predicated region
    $region2: #{tpu_custom_call.1} parent=1 // pred_check
      _
    $region3: #{tpu_custom_call.1} parent=1 // pred_check_branch
      %16 = sbr.rel (0) target = $region5
    $region4: #{tpu_custom_call.1} parent=1 // pred_region
      %s18 = ssub.s32 128, 128
      %19 = vsyncadd [#allocation3], %s18
      %s21 = sshll.u32 [#allocation2], 4
      %s22 = int_to_ptr.vmem [resolvable:$true] %s21
      %24 = dma.hbm_to_vmem [thread:$0]  %s0, 128, %s22, [#allocation3]
    $region5: #{tpu_custom_call.1} parent=1 // pred_fallthru
      _
    // Predicated region
    $region6: #{tpu_custom_call.1} parent=1 // pred_check
      _
    $region7: #{tpu_custom_call.1} parent=1 // pred_check_branch
      %26 = sbr.rel (0) target = $region9
    $region8: #{tpu_custom_call.1} parent=1 // pred_region
      _
    $region9: #{tpu_custom_call.1} parent=1 // pred_fallthru
      _
    // Predicated region
    $region10: #{tpu_custom_call.1} parent=1 // pred_check
      _
    $region11: #{tpu_custom_call.1} parent=1 // pred_check_branch
      %28 = sbr.rel (0) target = $region13
    $region12: #{tpu_custom_call.1} parent=1 // pred_region
      _
    $region13: #{tpu_custom_call.1} parent=1 // pred_fallthru
      _
    // Predicated region
    $region14: #{tpu_custom_call.1} parent=1 // pred_check
      _
    $region15: #{tpu_custom_call.1} parent=1 // pred_check_branch
      %30 = sbr.rel (0) target = $region17
    $region16: #{tpu_custom_call.1} parent=1 // pred_region
      %s32 = ssub.s32 2048, 2048
      %33 = vsyncadd [#allocation6], %s32
      %s34 = sshll.u32 [#allocation5], 4
      %s35 = int_to_ptr.vmem [resolvable:$true] %s34
      %40 = dma.hbm_to_vmem [thread:$0]  %s3, 2048, %s35, [#allocation6], 128, 128, 8
    $region17: #{tpu_custom_call.1} parent=1 // pred_fallthru
      _
    // Predicated region
    $region18: #{tpu_custom_call.1} parent=1 // pred_check
      _
    $region19: #{tpu_custom_call.1} parent=1 // pred_check_branch
      %42 = sbr.rel (0) target = $region21
    $region20: #{tpu_custom_call.1} parent=1 // pred_region
      _
    $region21: #{tpu_custom_call.1} parent=1 // pred_fallthru
      _
    // Predicated region
    $region22: #{tpu_custom_call.1} parent=1 // pred_check
      _
    $region23: #{tpu_custom_call.1} parent=1 // pred_check_branch
      %44 = sbr.rel (0) target = $region25
    $region24: #{tpu_custom_call.1} parent=1 // pred_region
      %s46 = ssub.s32 4096, 4096
      %47 = vsyncadd [#allocation6], %s46
      %s48 = sshll.u32 [#allocation7], 4
      %s49 = int_to_ptr.vmem [resolvable:$true] %s48
      %54 = dma.hbm_to_vmem [thread:$0]  %s5, 4096, %s49, [#allocation6], 128, 128, 8
    $region25: #{tpu_custom_call.1} parent=1 // pred_fallthru
      _
    // Predicated region
    $region26: #{tpu_custom_call.1} parent=1 // pred_check
      _
    $region27: #{tpu_custom_call.1} parent=1 // pred_check_branch
      %56 = sbr.rel (0) target = $region29
    $region28: #{tpu_custom_call.1} parent=1 // pred_region
      _
    $region29: #{tpu_custom_call.1} parent=1 // pred_fallthru
      _
    // Predicated region
    $region30: #{tpu_custom_call.1} parent=1 // pred_check
      _
    $region31: #{tpu_custom_call.1} parent=1 // pred_check_branch
      %58 = sbr.rel (0) target = $region33
    $region32: #{tpu_custom_call.1} parent=1 // pred_region
      %59 = dma.done [#allocation3], 128
    $region33: #{tpu_custom_call.1} parent=1 // pred_fallthru
      _
    // Predicated region
    $region34: #{tpu_custom_call.1} parent=1 // pred_check
      _
    $region35: #{tpu_custom_call.1} parent=1 // pred_check_branch
      %61 = sbr.rel (0) target = $region37
    $region36: #{tpu_custom_call.1} parent=1 // pred_region
      %62 = dma.done [#allocation6], 2048
    $region37: #{tpu_custom_call.1} parent=1 // pred_fallthru
      _
    // Predicated region
    $region38: #{tpu_custom_call.1} parent=1 // pred_check
      _
    $region39: #{tpu_custom_call.1} parent=1 // pred_check_branch
      %64 = sbr.rel (0) target = $region41
    $region40: #{tpu_custom_call.1} parent=1 // pred_region
      %65 = dma.done [#allocation6], 4096
    $region41: #{tpu_custom_call.1} parent=1 // pred_fallthru
      _
    %v66 = vld [vmem:[#allocation2] sm:$0xff]
    %v67 = vld [vmem:[%s1] sm:$0x1]
    %v69 = vlaneseq
    %v70 = vshrl.u32 %v69, 7
    %v71 = vsub.s32 0, %v70
    %v72 = vrot.slane %v67, %v71
    %v74 = vmul.f32 %v66, %v72
    %v75 = vld [vmem:[%s2] sm:$0x1]
    %v77 = vlaneseq
    %v78 = vshrl.u32 %v77, 7
    %v79 = vsub.s32 0, %v78
    %v80 = vrot.slane %v75, %v79
    %v82 = vadd.f32 %v74, %v80
    %v83 = vmin.f32 %v82, 20.0
    %v84 = vmul.f32 %v83, 1.442695
    %v85 = vpow.pop %v84
    %v86 = vadd.f32 %v85, 2.0
    %v87 = vmul.f32 %v85, %v86
    %v88 = vadd.f32 %v87, 2.0
    %v89 = vrcp.pop %v88
    %v90 = vmul.f32 %v87, %v89
    %vm91 = vcmp.gt.f32.partialorder %v82, 20.0
    %v92 = vmul.f32 %v82, %v90
    %v93 = vsel %vm91, %v82, %v92
    %v94 = vld [vmem:[#allocation5] sm:$0xff]
    %v95 = vld [vmem:[#allocation5 + $0x8] sm:$0xff]
    %v96 = vld [vmem:[#allocation5 + $0x10] sm:$0xff]
    %v97 = vld [vmem:[#allocation5 + $0x18] sm:$0xff]
    %v98 = vld [vmem:[#allocation5 + $0x20] sm:$0xff]
    %v99 = vld [vmem:[#allocation5 + $0x28] sm:$0xff]
    %v100 = vld [vmem:[#allocation5 + $0x30] sm:$0xff]
    %v101 = vld [vmem:[#allocation5 + $0x38] sm:$0xff]
    %v102 = vld [vmem:[#allocation5 + $0x40] sm:$0xff]
    %v103 = vld [vmem:[#allocation5 + $0x48] sm:$0xff]
    %v104 = vld [vmem:[#allocation5 + $0x50] sm:$0xff]
    %v105 = vld [vmem:[#allocation5 + $0x58] sm:$0xff]
    %v106 = vld [vmem:[#allocation5 + $0x60] sm:$0xff]
    %v107 = vld [vmem:[#allocation5 + $0x68] sm:$0xff]
    %v108 = vld [vmem:[#allocation5 + $0x70] sm:$0xff]
    %v109 = vld [vmem:[#allocation5 + $0x78] sm:$0xff]
    %v110 = vld [vmem:[%s4] sm:$0x1]
    %v112 = vlaneseq
    %v113 = vshrl.u32 %v112, 7
    %v114 = vsub.s32 0, %v113
    %v115 = vrot.slane %v110, %v114
    %117 = vmatprep.subr.mxu0 0.0
    %118 = vmatpush1.msra.mxu0 %v94
    %119 = vmatprep.subr.mxu0 0.0
    %120 = vmatpush1.msra.mxu0 %v95
    %121 = vmatprep.subr.mxu0 0.0
    %122 = vmatpush1.msra.mxu0 %v96
    %123 = vmatprep.subr.mxu0 0.0
    %124 = vmatpush1.msra.mxu0 %v97
    %125 = vmatprep.subr.mxu0 0.0
    %126 = vmatpush1.msra.mxu0 %v98
    %127 = vmatprep.subr.mxu0 0.0
    %128 = vmatpush1.msra.mxu0 %v99
    %129 = vmatprep.subr.mxu0 0.0
    %130 = vmatpush1.msra.mxu0 %v100
    %131 = vmatprep.subr.mxu0 0.0
    %132 = vmatpush1.msra.mxu0 %v101
    %133 = vmatprep.subr.mxu0 0.0
    %134 = vmatpush1.msra.mxu0 %v102
    %135 = vmatprep.subr.mxu0 0.0
    %136 = vmatpush1.msra.mxu0 %v103
    %137 = vmatprep.subr.mxu0 0.0
    %138 = vmatpush1.msra.mxu0 %v104
    %139 = vmatprep.subr.mxu0 0.0
    %140 = vmatpush1.msra.mxu0 %v105
    %141 = vmatprep.subr.mxu0 0.0
    %142 = vmatpush1.msra.mxu0 %v106
    %143 = vmatprep.subr.mxu0 0.0
    %144 = vmatpush1.msra.mxu0 %v107
    %145 = vmatprep.subr.mxu0 0.0
    %146 = vmatpush1.msra.mxu0 %v108
    %147 = vmatprep.subr.mxu0 0.0
    %148 = vmatpush1.msra.mxu0 %v109
    %149 = vmatprep.subr.mxu0 0.0
    %150 = vmatpush1.msra.mxu0 0.0
    %151 = vmatprep.subr.mxu0 0.0
    %152 = vmatpush1.msra.mxu0 0.0
    %153 = vmatprep.subr.mxu0 0.0
    %154 = vmatpush1.msra.mxu0 0.0
    %155 = vmatprep.subr.mxu0 0.0
    %156 = vmatpush1.msra.mxu0 0.0
    %157 = vmatprep.subr.mxu0 0.0
    %158 = vmatpush1.msra.mxu0 0.0
    %159 = vmatprep.subr.mxu0 0.0
    %160 = vmatpush1.msra.mxu0 0.0
    %161 = vmatprep.subr.mxu0 0.0
    %162 = vmatpush1.msra.mxu0 0.0
    %163 = vmatprep.subr.mxu0 0.0
    %164 = vmatpush1.msra.mxu0 0.0
    %165 = vmatprep.subr.mxu0 0.0
    %166 = vmatpush1.msra.mxu0 0.0
    %167 = vmatprep.subr.mxu0 0.0
    %168 = vmatpush1.msra.mxu0 0.0
    %169 = vmatprep.subr.mxu0 0.0
    %170 = vmatpush1.msra.mxu0 0.0
    %171 = vmatprep.subr.mxu0 0.0
    %172 = vmatpush1.msra.mxu0 0.0
    %173 = vmatprep.subr.mxu0 0.0
    %174 = vmatpush1.msra.mxu0 0.0
    %175 = vmatprep.subr.mxu0 0.0
    %176 = vmatpush1.msra.mxu0 0.0
    %177 = vmatprep.subr.mxu0 0.0
    %178 = vmatpush1.msra.mxu0 0.0
    %179 = vmatprep.subr.mxu0 0.0
    %180 = vmatpush1.msra.mxu0 0.0
    %181 = vmatprep.mubr.f32.mxu0 0.0
    %182 = vmatmul.mubr.f32.gmra.mrb[0].mxu0 %v93
    %v183 = vpop.f32.mrb[0].mxu0
    %v184 = vadd.f32 %v115, %v183
    %v185 = vpop.f32.mrb[0].mxu0
    %186 = vdwg.mxu0
    %v187 = vmin.f32 %v184, 20.0
    %v188 = vmul.f32 %v187, 1.442695
    %v189 = vpow.pop %v188
    %v190 = vadd.f32 %v189, 2.0
    %v191 = vmul.f32 %v189, %v190
    %v192 = vadd.f32 %v191, 2.0
    %v193 = vrcp.pop %v192
    %v194 = vmul.f32 %v191, %v193
    %vm195 = vcmp.gt.f32.partialorder %v184, 20.0
    %v196 = vmul.f32 %v184, %v194
    %v197 = vsel %vm195, %v184, %v196
    %v198 = vld [vmem:[#allocation7] sm:$0xff]
    %v199 = vld [vmem:[#allocation7 + $0x8] sm:$0xff]
    %v200 = vld [vmem:[#allocation7 + $0x10] sm:$0xff]
    %v201 = vld [vmem:[#allocation7 + $0x18] sm:$0xff]
    %v202 = vld [vmem:[#allocation7 + $0x20] sm:$0xff]
    %v203 = vld [vmem:[#allocation7 + $0x28] sm:$0xff]
    %v204 = vld [vmem:[#allocation7 + $0x30] sm:$0xff]
    %v205 = vld [vmem:[#allocation7 + $0x38] sm:$0xff]
    %v206 = vld [vmem:[#allocation7 + $0x40] sm:$0xff]
    %v207 = vld [vmem:[#allocation7 + $0x48] sm:$0xff]
    %v208 = vld [vmem:[#allocation7 + $0x50] sm:$0xff]
    %v209 = vld [vmem:[#allocation7 + $0x58] sm:$0xff]
    %v210 = vld [vmem:[#allocation7 + $0x60] sm:$0xff]
    %v211 = vld [vmem:[#allocation7 + $0x68] sm:$0xff]
    %v212 = vld [vmem:[#allocation7 + $0x70] sm:$0xff]
    %v213 = vld [vmem:[#allocation7 + $0x78] sm:$0xff]
    %v214 = vld [vmem:[#allocation7 + $0x80] sm:$0xff]
    %v215 = vld [vmem:[#allocation7 + $0x88] sm:$0xff]
    %v216 = vld [vmem:[#allocation7 + $0x90] sm:$0xff]
    %v217 = vld [vmem:[#allocation7 + $0x98] sm:$0xff]
    %v218 = vld [vmem:[#allocation7 + $0xa0] sm:$0xff]
    %v219 = vld [vmem:[#allocation7 + $0xa8] sm:$0xff]
    %v220 = vld [vmem:[#allocation7 + $0xb0] sm:$0xff]
    %v221 = vld [vmem:[#allocation7 + $0xb8] sm:$0xff]
    %v222 = vld [vmem:[#allocation7 + $0xc0] sm:$0xff]
    %v223 = vld [vmem:[#allocation7 + $0xc8] sm:$0xff]
    %v224 = vld [vmem:[#allocation7 + $0xd0] sm:$0xff]
    %v225 = vld [vmem:[#allocation7 + $0xd8] sm:$0xff]
    %v226 = vld [vmem:[#allocation7 + $0xe0] sm:$0xff]
    %v227 = vld [vmem:[#allocation7 + $0xe8] sm:$0xff]
    %v228 = vld [vmem:[#allocation7 + $0xf0] sm:$0xff]
    %v229 = vld [vmem:[#allocation7 + $0xf8] sm:$0xff]
    %v230 = vld [vmem:[%s6] sm:$0x1]
    %v232 = vlaneseq
    %v233 = vshrl.u32 %v232, 7
    %v234 = vsub.s32 0, %v233
    %v235 = vrot.slane %v230, %v234
    %237 = vmatprep.subr.mxu0 0.0
    %238 = vmatpush1.msra.mxu0 %v198
    %239 = vmatprep.subr.mxu0 0.0
    %240 = vmatpush1.msra.mxu0 %v199
    %241 = vmatprep.subr.mxu0 0.0
    %242 = vmatpush1.msra.mxu0 %v200
    %243 = vmatprep.subr.mxu0 0.0
    %244 = vmatpush1.msra.mxu0 %v201
    %245 = vmatprep.subr.mxu0 0.0
    %246 = vmatpush1.msra.mxu0 %v202
    %247 = vmatprep.subr.mxu0 0.0
    %248 = vmatpush1.msra.mxu0 %v203
    %249 = vmatprep.subr.mxu0 0.0
    %250 = vmatpush1.msra.mxu0 %v204
    %251 = vmatprep.subr.mxu0 0.0
    %252 = vmatpush1.msra.mxu0 %v205
    %253 = vmatprep.subr.mxu0 0.0
    %254 = vmatpush1.msra.mxu0 %v206
    %255 = vmatprep.subr.mxu0 0.0
    %256 = vmatpush1.msra.mxu0 %v207
    %257 = vmatprep.subr.mxu0 0.0
    %258 = vmatpush1.msra.mxu0 %v208
    %259 = vmatprep.subr.mxu0 0.0
    %260 = vmatpush1.msra.mxu0 %v209
    %261 = vmatprep.subr.mxu0 0.0
    %262 = vmatpush1.msra.mxu0 %v210
    %263 = vmatprep.subr.mxu0 0.0
    %264 = vmatpush1.msra.mxu0 %v211
    %265 = vmatprep.subr.mxu0 0.0
    %266 = vmatpush1.msra.mxu0 %v212
    %267 = vmatprep.subr.mxu0 0.0
    %268 = vmatpush1.msra.mxu0 %v213
    %269 = vmatprep.subr.mxu0 0.0
    %270 = vmatpush1.msra.mxu0 %v214
    %271 = vmatprep.subr.mxu0 0.0
    %272 = vmatpush1.msra.mxu0 %v215
    %273 = vmatprep.subr.mxu0 0.0
    %274 = vmatpush1.msra.mxu0 %v216
    %275 = vmatprep.subr.mxu0 0.0
    %276 = vmatpush1.msra.mxu0 %v217
    %277 = vmatprep.subr.mxu0 0.0
    %278 = vmatpush1.msra.mxu0 %v218
    %279 = vmatprep.subr.mxu0 0.0
    %280 = vmatpush1.msra.mxu0 %v219
    %281 = vmatprep.subr.mxu0 0.0
    %282 = vmatpush1.msra.mxu0 %v220
    %283 = vmatprep.subr.mxu0 0.0
    %284 = vmatpush1.msra.mxu0 %v221
    %285 = vmatprep.subr.mxu0 0.0
    %286 = vmatpush1.msra.mxu0 %v222
    %287 = vmatprep.subr.mxu0 0.0
    %288 = vmatpush1.msra.mxu0 %v223
    %289 = vmatprep.subr.mxu0 0.0
    %290 = vmatpush1.msra.mxu0 %v224
    %291 = vmatprep.subr.mxu0 0.0
    %292 = vmatpush1.msra.mxu0 %v225
    %293 = vmatprep.subr.mxu0 0.0
    %294 = vmatpush1.msra.mxu0 %v226
    %295 = vmatprep.subr.mxu0 0.0
    %296 = vmatpush1.msra.mxu0 %v227
    %297 = vmatprep.subr.mxu0 0.0
    %298 = vmatpush1.msra.mxu0 %v228
    %299 = vmatprep.subr.mxu0 0.0
    %300 = vmatpush1.msra.mxu0 %v229
    %301 = vmatprep.mubr.f32.mxu0 %v66
    %302 = vmatmul.mubr.f32.gmra.mrb[0].mxu0 %v197
    %v303 = vpop.f32.mrb[0].mxu0
    %v304 = vadd.f32 %v235, %v303
    %v305 = vpop.f32.mrb[0].mxu0
    %306 = vdwg.mxu0
    %307 = vst [vmem:[#allocation8] sm:$0xff] %v304
    // Predicated region
    $region42: #{tpu_custom_call.1} parent=1 // pred_check
      _
    $region43: #{tpu_custom_call.1} parent=1 // pred_check_branch
      %309 = sbr.rel (0) target = $region45
    $region44: #{tpu_custom_call.1} parent=1 // pred_region
      %s311 = ssub.s32 128, 128
      %312 = vsyncadd [#allocation4], %s311
      %s314 = sshll.u32 [#allocation8], 4
      %s315 = int_to_ptr.vmem [resolvable:$true] %s314
      %317 = dma.vmem_to_hbm [thread:$0]  %s315, 128, %s7, [#allocation4]
    $region45: #{tpu_custom_call.1} parent=1 // pred_fallthru
      _
    // Predicated region
    $region46: #{tpu_custom_call.1} parent=1 // pred_check
      _
    $region47: #{tpu_custom_call.1} parent=1 // pred_check_branch
      %319 = sbr.rel (0) target = $region49
    $region48: #{tpu_custom_call.1} parent=1 // pred_region
      %320 = dma.done [#allocation4], 128
    $region49: #{tpu_custom_call.1} parent=1 // pred_fallthru
      _
    %321 = vsyncpa [#allocation3], 1
    %322 = vsyncpa [#allocation6], 1
    %323 = vsyncpa [#allocation4], 1

</llo_original>
